<compile_context>
chip_gen: v6e
topology: v6e:2x2x1
jax: 0.10.0
libtpu: 0.0.40
codegen_flags: <defaults>
</compile_context>

<pallas_src>
import jax
import jax.numpy as jnp
from jax.experimental import pallas as pl
from jax.experimental.pallas import tpu as pltpu


def _round_up(x: int, m: int) -> int:
    return ((x + m - 1) // m) * m


def get_sin_cos_embeddings(context_size: int, embed_size: int) -> jnp.ndarray:
    """Deterministic parameter init, identical math to the torch version."""
    assert embed_size % 2 == 0, "embed_size must be even"
    pos = jnp.arange(context_size, dtype=jnp.float32)[:, None]          # (C, 1)
    i = jnp.arange(embed_size // 2, dtype=jnp.float32)[None, :]         # (1, E/2)
    inv_freq = 1.0 / (10000.0 ** (2.0 * i / embed_size))                # (1, E/2)
    angles = pos * inv_freq                                             # (C, E/2)
    emb = jnp.zeros((context_size, embed_size), dtype=jnp.float32)
    emb = emb.at[:, 0::2].set(jnp.sin(angles))
    emb = emb.at[:, 1::2].set(jnp.cos(angles))
    return emb


def _gather_kernel(idx_ref, table_ref, o_ref):
    """One-hot MXU gather of tile_n table rows into a dense output slab.

    idx_ref   : (tile_n, 1) int32 in VMEM (already clamped in the wrapper)
    table_ref : (C, E)      in VMEM, resident across the whole grid
    o_ref     : (tile_n, E) output tile in VMEM
    """
    tile_n = o_ref.shape[0]
    ctx = table_ref.shape[0]
    ids = idx_ref[...]                                            # (tile_n, 1)
    # One-hot built on the VPU; the gather becomes a single MXU matmul that
    # produces a dense (tile_n, E) slab -> unmasked vector stores.
    # TODO(synk): for very large context sizes, chunk the one-hot over C and
    # accumulate to bound the (tile_n, C) temporary.
    onehot = (jax.lax.broadcasted_iota(jnp.int32, (tile_n, ctx), 1)
              == ids).astype(table_ref.dtype)
    o_ref[...] = jnp.dot(onehot, table_ref[...],
                         preferred_element_type=jnp.float32).astype(o_ref.dtype)


def sincos_position_encoding(t: jnp.ndarray, table: jnp.ndarray,
                             *, max_tile_n: int = 512) -> jnp.ndarray:
    """Pallas equivalent of SinCosPositionEncoding.forward(t)."""
    B, T = t.shape
    C, E = table.shape
    n = B * T
    # Clamp once, vectorized (nn.Embedding would error on OOB; clamping keeps
    # the kernel memory-safe for bad indices).
    flat_idx = jnp.clip(t.reshape(n, 1).astype(jnp.int32), 0, C - 1)

    # Tile selection: tile_n must be a multiple of 8 (f32 sublane tiling).
    # Prefer a tile that divides n exactly so no padding (and no post-call
    # out[:n] copy) is required; otherwise fall back to 512-row tiles.
    n8 = _round_up(n, 8)
    if n8 <= max_tile_n:
        tile_n = n8
    else:
        tile_n = 0
        for cand in (512, 384, 256, 128, 64, 32, 16, 8):
            if cand <= max_tile_n and n % cand == 0:
                tile_n = cand
                break
        if tile_n == 0:
            tile_n = min(512, max_tile_n)
    n_pad = _round_up(n, tile_n)
    if n_pad != n:
        flat_idx = jnp.pad(flat_idx, ((0, n_pad - n), (0, 0)))
    grid = (n_pad // tile_n,)

    itemsize = jnp.dtype(table.dtype).itemsize
    # VMEM plan: resident table (conservatively assume double-buffered),
    # double-buffered output tiles, tiny index tiles, one-hot temporary.
    # TODO(synk): for tables near v7x's 64 MiB VMEM budget, tile over E (or
    # cast the table to bf16) and single-buffer it with pl.Buffered(1).
    vmem_needed = (2 * C * E * itemsize
                   + 2 * tile_n * E * itemsize
                   + 2 * tile_n * 4
                   + tile_n * C * 4
                   + (1 << 20))
    vmem_limit = max(int(vmem_needed), 32 * 1024 * 1024)

    cost = pl.CostEstimate(
        flops=2 * n_pad * C * E,
        transcendentals=0,
        bytes_accessed=C * E * itemsize + n_pad * 4 + n_pad * E * itemsize,
    )

    out = pl.pallas_call(
        _gather_kernel,
        out_shape=jax.ShapeDtypeStruct((n_pad, E), table.dtype),
        grid_spec=pltpu.PrefetchScalarGridSpec(
            num_scalar_prefetch=0,
            grid=grid,
            in_specs=[
                # Per-tile index vector (one vector load per step).
                pl.BlockSpec((tile_n, 1), lambda i: (i, 0)),
                # Whole table, constant block index -> fetched once, resident.
                pl.BlockSpec((C, E), lambda i: (0, 0)),
            ],
            out_specs=pl.BlockSpec((tile_n, E), lambda i: (i, 0)),
        ),
        compiler_params=pltpu.CompilerParams(
            # TODO(synk): pltpu.CORE_PARALLEL would shard the tile axis across
            # v7x's two TensorCores once the kernel stops being HBM-bound.
            dimension_semantics=("parallel",),
            vmem_limit_bytes=vmem_limit,
        ),
        cost_estimate=cost,
    )(flat_idx, table)

    if n_pad != n:
        out = out[:n]
    return out.reshape(B, T, E)


if __name__ == "__main__":
    context_size = 16
    embed_size = 32
    B, T = 2, 8

    key = jax.random.PRNGKey(0)
    t = jax.random.randint(key, (B, T), 0, context_size, dtype=jnp.int32)

    table = get_sin_cos_embeddings(context_size, embed_size)

    out = sincos_position_encoding(t, table)
    out = jax.block_until_ready(out)

    # Reference check: plain gather.  f32 MXU matmuls are multi-pass bf16
    # decompositions, so allow a small tolerance on the one-hot gather.
    ref = table[t]
    assert out.shape == (B, T, embed_size)
    assert jnp.allclose(out, ref, atol=1e-4, rtol=1e-4), "mismatch vs reference gather"

    print("KERNEL_OK")
</pallas_src>

<mosaic_0001>
module attributes {stable_mosaic.version = 11 : i64} {
  func.func @_gather_kernel(%arg0: i32, %arg1: memref<16x1xi32, #tpu.memory_space<vmem>>, %arg2: memref<16x32xf32, #tpu.memory_space<vmem>>, %arg3: memref<16x32xf32, #tpu.memory_space<vmem>>) attributes {dimension_semantics = [#tpu.dimension_semantics<parallel>], iteration_bounds = array<i64: 1>, scalar_prefetch = 0 : i64, scratch_operands = 0 : i64, tpu.core_type = #tpu.core_type<tc>, window_params = [{transform_indices = @transform_0, window_bounds = array<i64: 16, 1>}, {pipeline_mode = #tpu.pipeline_mode<synchronous>, transform_indices = @transform_1, window_bounds = array<i64: 16, 32>}, {transform_indices = @transform_2, window_bounds = array<i64: 16, 32>}]} {
    %c0 = arith.constant 0 : index
    %c0_0 = arith.constant 0 : index
    %0 = vector.load %arg1[%c0, %c0_0] : memref<16x1xi32, #tpu.memory_space<vmem>>, vector<16x1xi32>
    %1 = tpu.iota {dimensions = array<i32: 1>} : vector<16x16xi32>
    %2 = vector.broadcast %0 : vector<16x1xi32> to vector<16x16xi32>
    %3 = arith.cmpi eq, %1, %2 : vector<16x16xi32>
    %4 = arith.extui %3 : vector<16x16xi1> to vector<16x16xi32>
    %5 = arith.sitofp %4 : vector<16x16xi32> to vector<16x16xf32>
    %c0_1 = arith.constant 0 : index
    %c0_2 = arith.constant 0 : index
    %6 = vector.load %arg2[%c0_1, %c0_2] : memref<16x32xf32, #tpu.memory_space<vmem>>, vector<16x32xf32>
    %cst = arith.constant dense<0.000000e+00> : vector<16x32xf32>
    %7 = tpu.matmul %5, %6, %cst {dimension_numbers = #tpu.dot_dimension_numbers<[1], [0], [0], [1], [0, 0, 1, 1], [], []>} : vector<16x16xf32>, vector<16x32xf32>, vector<16x32xf32> -> vector<16x32xf32>
    %c0_3 = arith.constant 0 : index
    %c0_4 = arith.constant 0 : index
    %8 = vector.load %arg3[%c0_3, %c0_4] : memref<16x32xf32, #tpu.memory_space<vmem>>, vector<16x32xf32>
    tpu.vector_store %arg3[%c0_3, %c0_4], %7 {strides = array<i32>} : memref<16x32xf32, #tpu.memory_space<vmem>>, vector<16x32xf32>,
    return
  }
  func.func @transform_0(%arg0: i32) -> (i32, i32) {
    %c0_i32 = arith.constant 0 : i32
    %c0_i32_0 = arith.constant 0 : i32
    return %arg0, %c0_i32 : i32, i32
  }
  func.func @transform_1(%arg0: i32) -> (i32, i32) {
    %c0_i32 = arith.constant 0 : i32
    %c0_i32_0 = arith.constant 0 : i32
    %c0_i32_1 = arith.constant 0 : i32
    return %c0_i32, %c0_i32_0 : i32, i32
  }
  func.func @transform_2(%arg0: i32) -> (i32, i32) {
    %c0_i32 = arith.constant 0 : i32
    %c0_i32_0 = arith.constant 0 : i32
    return %arg0, %c0_i32 : i32, i32
  }
}

</mosaic_0001>

<llo_original>
// kernel: tpu_custom_call.1
$region0: #{tpu_custom_call.1}
  #allocation0 [shape = 'u32[]', space=smem, size = 0x4, offset = 0x4, fixed_abs, tag = 'smem constant byte address 0x4 - core index']
  #allocation1 [shape = 'u32[144,128]{1,0:T(1,128)}', space=vmem, size = 0x12000, scoped, tag = 'internal scratch']
  %s0 = inlined_call_operand.vmem [shape: s32[16,1], index: 0, kind: input, shape index: {}]
  %s1 = inlined_call_operand.vmem [shape: f32[16,32], index: 1, kind: input, shape index: {}]
  %s2 = inlined_call_operand.hbm [shape: f32[16,32], index: 2, kind: output, shape index: {}]
  %s3 = sld [smem:[#allocation0]]
  $region18: #{tpu_custom_call.1} parent=0
    _
  %s5 = ssub.s32 1, %s3
  %s6 = scalar_select 0, %s5, %s3
  $region1: #{tpu_custom_call.1} parent=0
    #allocation2 [shape = 'u8[8192]{0}', space=vmem, size = 0x2000, scoped, tag = 'output window, operand 0, single buffered']
    #allocation3 [shape = 's32[1]{0}', space=sflag, size = 0x4, scoped, tag = 'scoped memory for tpu_custom_call.1']
    %7 = vsyncpa [#allocation3], 0
    // Predicated region
    $region2: #{tpu_custom_call.1} parent=1 // pred_check
      _
    $region3: #{tpu_custom_call.1} parent=1 // pred_check_branch
      %9 = sbr.rel (0) target = $region5
    $region4: #{tpu_custom_call.1} parent=1 // pred_region
      _
    $region5: #{tpu_custom_call.1} parent=1 // pred_fallthru
      _
    // Predicated region
    $region6: #{tpu_custom_call.1} parent=1 // pred_check
      _
    $region7: #{tpu_custom_call.1} parent=1 // pred_check_branch
      %11 = sbr.rel (0) target = $region9
    $region8: #{tpu_custom_call.1} parent=1 // pred_region
      _
    $region9: #{tpu_custom_call.1} parent=1 // pred_fallthru
      _
    %v12 = vld [vmem:[%s0] sm:$0xff]
    %v13 = vld [vmem:[%s0 + $0x8] sm:$0xff]
    %v14 = vlaneseq
    %v15 = vand.u32 %v14, 127
    %16 = vset.pattern.permute.xlu0 0
    %17 = vperm.xlu0 %16, %v12
    %v18 = vpop.permute.xlu0 %17
    %19 = vset.pattern.permute.xlu0 0
    %20 = vperm.xlu0 %19, %v13
    %v21 = vpop.permute.xlu0 %20
    %vm22 = vcmp.eq.s32.totalorder %v15, %v18
    %vm23 = vcmp.eq.s32.totalorder %v15, %v21
    %v24 = vsel %vm22, 1, 0
    %v25 = vsel %vm23, 1, 0
    %v26 = vcvt.s32.f32 %v24
    %v27 = vcvt.s32.f32 %v25
    %v28 = vld [vmem:[%s1] sm:$0xff]
    %v29 = vld [vmem:[%s1 + $0x8] sm:$0xff]
    %vm30 = vcmask 130048
    %v32 = vsel %vm30, %v26, 0
    %v35 = vsel %vm30, %v27, 0
    %37 = vmatprep.subr.mxu0 0.0
    %38 = vmatpush1.msra.mxu0 0.0
    %39 = vmatprep.subr.mxu0 0.0
    %40 = vmatpush1.msra.mxu0 0.0
    %41 = vmatprep.subr.mxu0 0.0
    %42 = vmatpush1.msra.mxu0 0.0
    %43 = vmatprep.subr.mxu0 0.0
    %44 = vmatpush1.msra.mxu0 0.0
    %45 = vmatprep.subr.mxu0 0.0
    %46 = vmatpush1.msra.mxu0 0.0
    %47 = vmatprep.subr.mxu0 0.0
    %48 = vmatpush1.msra.mxu0 0.0
    %49 = vmatprep.subr.mxu0 0.0
    %50 = vmatpush1.msra.mxu0 0.0
    %51 = vmatprep.subr.mxu0 0.0
    %52 = vmatpush1.msra.mxu0 0.0
    %53 = vmatprep.subr.mxu0 0.0
    %54 = vmatpush1.msra.mxu0 0.0
    %55 = vmatprep.subr.mxu0 0.0
    %56 = vmatpush1.msra.mxu0 0.0
    %57 = vmatprep.subr.mxu0 0.0
    %58 = vmatpush1.msra.mxu0 0.0
    %59 = vmatprep.subr.mxu0 0.0
    %60 = vmatpush1.msra.mxu0 0.0
    %61 = vmatprep.subr.mxu0 0.0
    %62 = vmatpush1.msra.mxu0 0.0
    %63 = vmatprep.subr.mxu0 0.0
    %64 = vmatpush1.msra.mxu0 0.0
    %65 = vmatprep.subr.mxu0 0.0
    %66 = vmatpush1.msra.mxu0 %v29
    %67 = vmatprep.subr.mxu0 0.0
    %68 = vmatpush1.msra.mxu0 %v28
    %69 = vmatprep.subr.mxu0 0.0
    %70 = vmatpush2.msra.mxu0 0.0
    %71 = vmatprep.subr.mxu0 0.0
    %72 = vmatpush2.msra.mxu0 0.0
    %73 = vmatprep.subr.mxu0 0.0
    %74 = vmatpush2.msra.mxu0 0.0
    %75 = vmatprep.subr.mxu0 0.0
    %76 = vmatpush2.msra.mxu0 0.0
    %77 = vmatprep.subr.mxu0 0.0
    %78 = vmatpush2.msra.mxu0 0.0
    %79 = vmatprep.subr.mxu0 0.0
    %80 = vmatpush2.msra.mxu0 0.0
    %81 = vmatprep.subr.mxu0 0.0
    %82 = vmatpush2.msra.mxu0 0.0
    %83 = vmatprep.subr.mxu0 0.0
    %84 = vmatpush2.msra.mxu0 0.0
    %85 = vmatprep.subr.mxu0 0.0
    %86 = vmatpush2.msra.mxu0 0.0
    %87 = vmatprep.subr.mxu0 0.0
    %88 = vmatpush2.msra.mxu0 0.0
    %89 = vmatprep.subr.mxu0 0.0
    %90 = vmatpush2.msra.mxu0 0.0
    %91 = vmatprep.subr.mxu0 0.0
    %92 = vmatpush2.msra.mxu0 0.0
    %93 = vmatprep.subr.mxu0 0.0
    %94 = vmatpush2.msra.mxu0 0.0
    %95 = vmatprep.subr.mxu0 0.0
    %96 = vmatpush2.msra.mxu0 0.0
    %97 = vmatprep.subr.mxu0 0.0
    %98 = vmatpush2.msra.mxu0 0.0
    %99 = vmatprep.subr.mxu0 0.0
    %100 = vmatpush2.msra.mxu0 0.0
    %101 = vmatprep.mubr.f32.mxu0 0.0
    %102 = vmatmul.mubr.f32.gmra.mxu0 %v32
    %v103 = vpop.f32.mrf.mxu0
    %v104 = vadd.f32 0.0, %v103
    %v105 = vpop.f32.mrf.mxu0
    %106 = vmatprep.mubr.f32.mxu0 0.0
    %107 = vmatmul.mubr.f32.gmra.mxu0 %v35
    %v108 = vpop.f32.mrf.mxu0
    %v109 = vadd.f32 0.0, %v108
    %v110 = vpop.f32.mrf.mxu0
    %111 = vdwg.mxu0
    %vm112 = vcmask 261120
    %113 = vst.msk [vmem:[#allocation2] sm:$0xff] %vm112, %v104
    %114 = vst.msk [vmem:[#allocation2 + $0x8] sm:$0xff] %vm112, %v109
    // Predicated region
    $region10: #{tpu_custom_call.1} parent=1 // pred_check
      _
    $region11: #{tpu_custom_call.1} parent=1 // pred_check_branch
      %116 = sbr.rel (0) target = $region13
    $region12: #{tpu_custom_call.1} parent=1 // pred_region
      %s118 = ssub.s32 256, 256
      %119 = vsyncadd [#allocation3], %s118
      %s120 = sshll.u32 [#allocation2], 4
      %s121 = int_to_ptr.vmem [resolvable:$true] %s120
      %126 = dma.vmem_to_hbm [thread:$0]  %s121, 256, %s2, [#allocation3], 128, 128, 8
    $region13: #{tpu_custom_call.1} parent=1 // pred_fallthru
      _
    // Predicated region
    $region14: #{tpu_custom_call.1} parent=1 // pred_check
      _
    $region15: #{tpu_custom_call.1} parent=1 // pred_check_branch
      %128 = sbr.rel (0) target = $region17
    $region16: #{tpu_custom_call.1} parent=1 // pred_region
      %129 = dma.done [#allocation3], 256
    $region17: #{tpu_custom_call.1} parent=1 // pred_fallthru
      _
    %130 = vsyncpa [#allocation3], 1

</llo_original>
